<compile_context>
chip_gen: v7x
topology: tpu7x:2x2x1
jax: 0.10.0
libtpu: 0.0.40
codegen_flags: <defaults>
</compile_context>

<pallas_src>
import functools

import jax
import jax.numpy as jnp
from jax import lax
from jax.experimental import pallas as pl
from jax.experimental.pallas import tpu as pltpu

_BN_EPS = 1e-5


# -----------------------------------------------------------------------------
# tiling helpers
# -----------------------------------------------------------------------------
def _pick_tn(n, k):
    """Lane-dense Cout tile; keep the (K, tn) f32 weight tile <= ~2 MiB."""
    for t in (256, 128):
        if n % t == 0 and k * t * 4 <= (2 << 20):
            return t
    if n % 128 == 0:
        return 128
    return n


def _pick_tc(c):
    for t in (512, 256, 128):
        if c % t == 0:
            return t
    return c


# -----------------------------------------------------------------------------
# Kernel 1: fused  matmul(im2col) -> BatchNorm(train) -> [ReLU | +res,ReLU]
# -----------------------------------------------------------------------------
def _mm_bn_kernel(a_ref, b_ref, g_ref, be_ref, o_ref, *, relu):
    acc = jnp.dot(a_ref[...], b_ref[...], preferred_element_type=jnp.float32)
    inv_m = 1.0 / acc.shape[0]
    mean = jnp.sum(acc, axis=0, keepdims=True) * inv_m
    msq = jnp.sum(acc * acc, axis=0, keepdims=True) * inv_m
    var = msq - mean * mean
    scale = g_ref[...].astype(jnp.float32) * lax.rsqrt(var + _BN_EPS)
    shift = be_ref[...].astype(jnp.float32) - mean * scale
    y = acc * scale + shift
    if relu:
        y = jnp.maximum(y, 0.0)
    o_ref[...] = y.astype(o_ref.dtype)


def _mm_bn_add_relu_kernel(a_ref, b_ref, g_ref, be_ref, r_ref, o_ref):
    acc = jnp.dot(a_ref[...], b_ref[...], preferred_element_type=jnp.float32)
    inv_m = 1.0 / acc.shape[0]
    mean = jnp.sum(acc, axis=0, keepdims=True) * inv_m
    msq = jnp.sum(acc * acc, axis=0, keepdims=True) * inv_m
    var = msq - mean * mean
    scale = g_ref[...].astype(jnp.float32) * lax.rsqrt(var + _BN_EPS)
    shift = be_ref[...].astype(jnp.float32) - mean * scale
    y = acc * scale + shift + r_ref[...].astype(jnp.float32)
    o_ref[...] = jnp.maximum(y, 0.0).astype(o_ref.dtype)


def _mm_bn(a, b, gamma, beta, residual, *, relu):
    """(M,K) @ (K,N) -> training-mode BN over rows -> opt. ReLU / +res+ReLU."""
    M, K = a.shape
    _, N = b.shape
    tn = _pick_tn(N, K)
    a_spec = pl.BlockSpec((M, K), lambda j: (0, 0))   # resident across the grid
    b_spec = pl.BlockSpec((K, tn), lambda j: (0, j))
    v_spec = pl.BlockSpec((1, tn), lambda j: (0, j))
    o_spec = pl.BlockSpec((M, tn), lambda j: (0, j))
    if residual is None:
        kernel = functools.partial(_mm_bn_kernel, relu=relu)
        in_specs = [a_spec, b_spec, v_spec, v_spec]
        args = (a, b, gamma.reshape(1, N), beta.reshape(1, N))
    else:
        kernel = _mm_bn_add_relu_kernel
        in_specs = [a_spec, b_spec, v_spec, v_spec, o_spec]
        args = (a, b, gamma.reshape(1, N), beta.reshape(1, N), residual)
    return pl.pallas_call(
        kernel,
        out_shape=jax.ShapeDtypeStruct((M, N), a.dtype),
        grid=(N // tn,),
        in_specs=in_specs,
        out_specs=o_spec,
        compiler_params=pltpu.CompilerParams(
            dimension_semantics=("parallel",)),
    )(*args)


def _conv_bn_impl(x, w, gamma, beta, residual, *, stride, padding, relu):
    """im2col (layout plumbing) + fused matmul/BN Pallas kernel."""
    N, H, W, Cin = x.shape
    kh, kw, _, Cout = w.shape
    if padding:
        x = jnp.pad(x, ((0, 0), (padding, padding), (padding, padding), (0, 0)))
    Hp, Wp = H + 2 * padding, W + 2 * padding
    Ho = (Hp - kh) // stride + 1
    Wo = (Wp - kw) // stride + 1
    if kh == 1 and kw == 1:
        cols = x[:, ::stride, ::stride, :].reshape(N * Ho * Wo, Cin)
    else:
        patches = [
            x[:, i:i + stride * (Ho - 1) + 1:stride,
              j:j + stride * (Wo - 1) + 1:stride, :]
            for i in range(kh) for j in range(kw)
        ]
        cols = jnp.concatenate(patches, axis=-1).reshape(
            N * Ho * Wo, kh * kw * Cin)
    w2 = w.reshape(kh * kw * Cin, Cout)
    r2 = None if residual is None else residual.reshape(N * Ho * Wo, Cout)
    out = _mm_bn(cols, w2, gamma, beta, r2, relu=relu)
    return out.reshape(N, Ho, Wo, Cout)


_CONV_BN_CACHE = {}


def conv_bn_act(x, w, gamma, beta, *, stride=1, padding=0, relu=True,
                residual=None):
    key = (x.shape, w.shape, stride, padding, relu, residual is not None,
           str(x.dtype))
    fn = _CONV_BN_CACHE.get(key)
    if fn is None:
        fn = jax.jit(functools.partial(
            _conv_bn_impl, stride=stride, padding=padding, relu=relu))
        _CONV_BN_CACHE[key] = fn
    return fn(x, w, gamma, beta, residual)


# -----------------------------------------------------------------------------
# Kernel 2: tiled matmul + bias (+ ReLU)  (projection head)
# -----------------------------------------------------------------------------
def _matmul_bias_kernel(a_ref, b_ref, bias_ref, o_ref, *, relu):
    acc = jnp.dot(a_ref[...], b_ref[...], preferred_element_type=jnp.float32)
    acc = acc + bias_ref[...].astype(jnp.float32)
    if relu:
        acc = jnp.maximum(acc, 0.0)
    o_ref[...] = acc.astype(o_ref.dtype)


def matmul_bias(a, b, bias, relu=False):
    M, K = a.shape
    _, N = b.shape
    tn = _pick_tn(N, K)
    tm = M if M <= 256 else 128
    assert M % tm == 0 and N % tn == 0
    return pl.pallas_call(
        functools.partial(_matmul_bias_kernel, relu=relu),
        out_shape=jax.ShapeDtypeStruct((M, N), a.dtype),
        grid=(M // tm, N // tn),
        in_specs=[
            pl.BlockSpec((tm, K), lambda i, j: (i, 0)),
            pl.BlockSpec((K, tn), lambda i, j: (0, j)),
            pl.BlockSpec((1, tn), lambda i, j: (0, j)),
        ],
        out_specs=pl.BlockSpec((tm, tn), lambda i, j: (i, j)),
        compiler_params=pltpu.CompilerParams(
            dimension_semantics=("parallel", "parallel")),
    )(a, b, bias.reshape(1, N))


# -----------------------------------------------------------------------------
# Kernel 3: global average pool (AdaptiveAvgPool2d((1,1)) + flatten)
# -----------------------------------------------------------------------------
def _avgpool_kernel(x_ref, o_ref):
    x = x_ref[...].astype(jnp.float32)
    o_ref[...] = jnp.mean(x, axis=1).astype(o_ref.dtype)


def global_avgpool(x_nhwc):
    N, H, W, C = x_nhwc.shape
    hw = H * W
    x = x_nhwc.reshape(N, hw, C)
    tc = _pick_tc(C)
    return pl.pallas_call(
        _avgpool_kernel,
        out_shape=jax.ShapeDtypeStruct((N, C), x.dtype),
        grid=(C // tc,),
        in_specs=[pl.BlockSpec((N, hw, tc), lambda j: (0, 0, j))],
        out_specs=pl.BlockSpec((N, tc), lambda j: (0, j)),
        compiler_params=pltpu.CompilerParams(dimension_semantics=("parallel",)),
    )(x)


# -----------------------------------------------------------------------------
# Kernel 4: row-wise L2 normalize (F.normalize(dim=1))
# -----------------------------------------------------------------------------
def _l2norm_kernel(x_ref, o_ref, *, eps):
    x = x_ref[...].astype(jnp.float32)
    nrm = jnp.sqrt(jnp.sum(x * x, axis=1, keepdims=True))
    o_ref[...] = (x / jnp.maximum(nrm, eps)).astype(o_ref.dtype)


def l2_normalize(x, eps=1e-12):
    B, D = x.shape
    return pl.pallas_call(
        functools.partial(_l2norm_kernel, eps=eps),
        out_shape=jax.ShapeDtypeStruct((B, D), x.dtype),
        grid=(1,),
        in_specs=[pl.BlockSpec((B, D), lambda i: (0, 0))],
        out_specs=pl.BlockSpec((B, D), lambda i: (0, 0)),
        compiler_params=pltpu.CompilerParams(dimension_semantics=("arbitrary",)),
    )(x)


# -----------------------------------------------------------------------------
# Projection head (Linear-ReLU-Linear) + normalize, one jit per shape
# -----------------------------------------------------------------------------
def _head_impl(x4d, hp):
    feat = global_avgpool(x4d)                                  # (N, 2048)
    h = matmul_bias(feat, hp["w1"], hp["b1"], relu=True)
    h = matmul_bias(h, hp["w2"], hp["b2"], relu=False)
    return l2_normalize(h)


_HEAD_CACHE = {}


def head_forward(x4d, hp):
    key = (x4d.shape, hp["w1"].shape, hp["w2"].shape)
    fn = _HEAD_CACHE.get(key)
    if fn is None:
        fn = jax.jit(_head_impl)
        _HEAD_CACHE[key] = fn
    return fn(x4d, hp)


# -----------------------------------------------------------------------------
# ResNet-50 Bottleneck / full SupConResNet forward
# -----------------------------------------------------------------------------
def bottleneck_forward(x, p):
    out = conv_bn_act(x, p["w1"], p["g1"], p["b1"], relu=True)            # 1x1
    out = conv_bn_act(out, p["w2"], p["g2"], p["b2"],
                      stride=p["stride"], padding=1, relu=True)           # 3x3
    if p["shortcut"] is not None:
        sc = conv_bn_act(x, p["shortcut"]["w"], p["shortcut"]["g"],
                         p["shortcut"]["b"], stride=p["stride"], relu=False)
    else:
        sc = x
    # conv3 + bn3 + residual add + ReLU fused into one kernel
    return conv_bn_act(out, p["w3"], p["g3"], p["b3"], relu=True, residual=sc)


def _kaiming(key, shape):
    # kaiming_normal_(mode='fan_out', nonlinearity='relu'): std = sqrt(2/(kh*kw*Cout))
    kh, kw, _, cout = shape
    std = (2.0 / (kh * kw * cout)) ** 0.5
    return std * jax.random.normal(key, shape, jnp.float32)


def make_bottleneck_params(key, in_planes, planes, stride):
    exp = 4
    k1, k2, k3, k4 = jax.random.split(key, 4)
    p = {
        "stride": stride,
        "w1": _kaiming(k1, (1, 1, in_planes, planes)),
        "g1": jnp.ones((planes,), jnp.float32),
        "b1": jnp.zeros((planes,), jnp.float32),
        "w2": _kaiming(k2, (3, 3, planes, planes)),
        "g2": jnp.ones((planes,), jnp.float32),
        "b2": jnp.zeros((planes,), jnp.float32),
        "w3": _kaiming(k3, (1, 1, planes, exp * planes)),
        "g3": jnp.ones((exp * planes,), jnp.float32),
        "b3": jnp.zeros((exp * planes,), jnp.float32),
        "shortcut": None,
    }
    if stride != 1 or in_planes != exp * planes:
        p["shortcut"] = {
            "w": _kaiming(k4, (1, 1, in_planes, exp * planes)),
            "g": jnp.ones((exp * planes,), jnp.float32),
            "b": jnp.zeros((exp * planes,), jnp.float32),
        }
    return p


def make_resnet50_params(key, in_channel=3):
    k_conv1, k_layers = jax.random.split(key)
    params = {
        "conv1": _kaiming(k_conv1, (3, 3, in_channel, 64)),
        "g1": jnp.ones((64,), jnp.float32),
        "b1": jnp.zeros((64,), jnp.float32),
        "layers": [],
    }
    in_planes = 64
    cfg = [(64, 3, 1), (128, 4, 2), (256, 6, 2), (512, 3, 2)]  # resnet50
    lkey = k_layers
    for planes, nblocks, first_stride in cfg:
        strides = [first_stride] + [1] * (nblocks - 1)
        layer = []
        for s in strides:
            lkey, bkey = jax.random.split(lkey)
            layer.append(make_bottleneck_params(bkey, in_planes, planes, s))
            in_planes = planes * 4
        params["layers"].append(layer)
    return params, in_planes  # dim_in = 2048


def make_head_params(key, dim_in, feat_dim):
    k1, k2, k3, k4 = jax.random.split(key, 4)
    lim = 1.0 / (dim_in ** 0.5)
    return {
        "w1": jax.random.uniform(k1, (dim_in, dim_in), jnp.float32, -lim, lim),
        "b1": jax.random.uniform(k2, (dim_in,), jnp.float32, -lim, lim),
        "w2": jax.random.uniform(k3, (dim_in, feat_dim), jnp.float32, -lim, lim),
        "b2": jax.random.uniform(k4, (feat_dim,), jnp.float32, -lim, lim),
    }


def supcon_resnet_forward(x_nchw, enc_params, head_params):
    """SupConResNet.forward: encoder -> mlp head (Linear-ReLU-Linear) -> F.normalize."""
    x = jnp.transpose(x_nchw, (0, 2, 3, 1))                    # NCHW -> NHWC
    out = conv_bn_act(x, enc_params["conv1"], enc_params["g1"],
                      enc_params["b1"], stride=1, padding=1, relu=True)
    for layer in enc_params["layers"]:
        for block in layer:
            out = bottleneck_forward(out, block)
    return head_forward(out, head_params)


# -----------------------------------------------------------------------------
if __name__ == "__main__":
    root = jax.random.PRNGKey(0)
    (k_x, k_enc, k_head, k_c1, k_c2, k_c3,
     k_c4, k_c5, k_c6, k_c7) = jax.random.split(root, 10)

    # --- spot check: fused conv+BN+ReLU kernel vs pure JAX -------------------
    xc = jax.random.normal(k_c1, (2, 8, 8, 16), jnp.float32)
    wc = 0.1 * jax.random.normal(k_c2, (3, 3, 16, 32), jnp.float32)
    gc = 1.0 + 0.1 * jax.random.normal(k_c3, (32,), jnp.float32)
    bc = 0.1 * jax.random.normal(k_c4, (32,), jnp.float32)
    conv_ref = lax.conv_general_dilated(
        xc, wc, (1, 1), ((1, 1), (1, 1)),
        dimension_numbers=("NHWC", "HWIO", "NHWC"))
    mu = conv_ref.mean(axis=(0, 1, 2))
    var = conv_ref.var(axis=(0, 1, 2))
    bn_ref = jnp.maximum((conv_ref - mu) * lax.rsqrt(var + _BN_EPS) * gc + bc, 0.0)
    bn_got = conv_bn_act(xc, wc, gc, bc, stride=1, padding=1, relu=True)
    assert bool(jnp.allclose(bn_got, bn_ref, atol=2e-2, rtol=2e-2)), \
        "fused conv+BN kernel mismatch"

    # --- spot check: matmul + bias + ReLU kernel ------------------------------
    am = jax.random.normal(k_c5, (32, 48), jnp.float32)
    bm = jax.random.normal(k_c6, (48, 128), jnp.float32)
    bias = jnp.linspace(-1.0, 1.0, 128, dtype=jnp.float32)
    mm_ref = jnp.maximum(am @ bm + bias, 0.0)
    mm_got = matmul_bias(am, bm, bias, relu=True)
    assert bool(jnp.allclose(mm_got, mm_ref, atol=2e-2, rtol=2e-2)), \
        "matmul kernel mismatch"

    # --- full SupConResNet (resnet50 + mlp head, feat_dim=128) ---------------
    x = jax.random.normal(k_x, (2, 3, 16, 16), jnp.float32)    # small NCHW input
    enc_params, dim_in = make_resnet50_params(k_enc)
    head_params = make_head_params(k_head, dim_in, 128)

    feat = supcon_resnet_forward(x, enc_params, head_params)
    feat = jax.block_until_ready(feat)

    assert feat.shape == (2, 128)
    assert bool(jnp.all(jnp.isfinite(feat)))
    norms = jnp.sqrt(jnp.sum(feat * feat, axis=1))
    assert bool(jnp.allclose(norms, 1.0, atol=1e-4)), "output not L2-normalized"

    print("KERNEL_OK")
</pallas_src>

<mosaic_0001>
module attributes {stable_mosaic.version = 11 : i64} {
  func.func @_mm_bn_kernel(%arg0: i32, %arg1: memref<128x144xf32, #tpu.memory_space<vmem>>, %arg2: memref<144x32xf32, #tpu.memory_space<vmem>>, %arg3: memref<1x32xf32, #tpu.memory_space<vmem>>, %arg4: memref<1x32xf32, #tpu.memory_space<vmem>>, %arg5: memref<128x32xf32, #tpu.memory_space<vmem>>) attributes {dimension_semantics = [#tpu.dimension_semantics<parallel>], iteration_bounds = array<i64: 1>, scalar_prefetch = 0 : i64, scratch_operands = 0 : i64, tpu.core_type = #tpu.core_type<tc>, window_params = [{pipeline_mode = #tpu.pipeline_mode<synchronous>, transform_indices = @transform_0, window_bounds = array<i64: 128, 144>}, {transform_indices = @transform_1, window_bounds = array<i64: 144, 32>}, {transform_indices = @transform_2, window_bounds = array<i64: 1, 32>}, {transform_indices = @transform_3, window_bounds = array<i64: 1, 32>}, {transform_indices = @transform_4, window_bounds = array<i64: 128, 32>}]} {
    %c0 = arith.constant 0 : index
    %c0_0 = arith.constant 0 : index
    %0 = vector.load %arg1[%c0, %c0_0] : memref<128x144xf32, #tpu.memory_space<vmem>>, vector<128x144xf32>
    %c0_1 = arith.constant 0 : index
    %c0_2 = arith.constant 0 : index
    %1 = vector.load %arg2[%c0_1, %c0_2] : memref<144x32xf32, #tpu.memory_space<vmem>>, vector<144x32xf32>
    %cst = arith.constant dense<0.000000e+00> : vector<128x32xf32>
    %2 = tpu.matmul %0, %1, %cst {dimension_numbers = #tpu.dot_dimension_numbers<[1], [0], [0], [1], [0, 0, 1, 1], [], []>} : vector<128x144xf32>, vector<144x32xf32>, vector<128x32xf32> -> vector<128x32xf32>
    %cst_3 = arith.constant dense<0.000000e+00> : vector<32xf32>
    %3 = vector.multi_reduction <add>, %2, %cst_3 [0] : vector<128x32xf32> to vector<32xf32>
    %4 = vector.shape_cast %3 : vector<32xf32> to vector<1x32xf32>
    %cst_4 = arith.constant 7.812500e-03 : f32
    %5 = vector.broadcast %cst_4 : f32 to vector<1x32xf32>
    %6 = arith.mulf %4, %5 : vector<1x32xf32>
    %7 = arith.mulf %2, %2 : vector<128x32xf32>
    %cst_5 = arith.constant dense<0.000000e+00> : vector<32xf32>
    %8 = vector.multi_reduction <add>, %7, %cst_5 [0] : vector<128x32xf32> to vector<32xf32>
    %9 = vector.shape_cast %8 : vector<32xf32> to vector<1x32xf32>
    %cst_6 = arith.constant 7.812500e-03 : f32
    %10 = vector.broadcast %cst_6 : f32 to vector<1x32xf32>
    %11 = arith.mulf %9, %10 : vector<1x32xf32>
    %12 = arith.mulf %6, %6 : vector<1x32xf32>
    %13 = arith.subf %11, %12 : vector<1x32xf32>
    %c0_7 = arith.constant 0 : index
    %c0_8 = arith.constant 0 : index
    %14 = vector.load %arg3[%c0_7, %c0_8] : memref<1x32xf32, #tpu.memory_space<vmem>>, vector<1x32xf32>
    %cst_9 = arith.constant 9.99999974E-6 : f32
    %15 = vector.broadcast %cst_9 : f32 to vector<1x32xf32>
    %16 = arith.addf %13, %15 : vector<1x32xf32>
    %17 = math.rsqrt %16 : vector<1x32xf32>
    %18 = arith.mulf %14, %17 : vector<1x32xf32>
    %c0_10 = arith.constant 0 : index
    %c0_11 = arith.constant 0 : index
    %19 = vector.load %arg4[%c0_10, %c0_11] : memref<1x32xf32, #tpu.memory_space<vmem>>, vector<1x32xf32>
    %20 = arith.mulf %6, %18 : vector<1x32xf32>
    %21 = arith.subf %19, %20 : vector<1x32xf32>
    %22 = vector.broadcast %18 : vector<1x32xf32> to vector<128x32xf32>
    %23 = arith.mulf %2, %22 : vector<128x32xf32>
    %24 = vector.broadcast %21 : vector<1x32xf32> to vector<128x32xf32>
    %25 = arith.addf %23, %24 : vector<128x32xf32>
    %cst_12 = arith.constant 0.000000e+00 : f32
    %26 = vector.broadcast %cst_12 : f32 to vector<128x32xf32>
    %27 = arith.maximumf %25, %26 : vector<128x32xf32>
    %c0_13 = arith.constant 0 : index
    %c0_14 = arith.constant 0 : index
    %28 = vector.load %arg5[%c0_13, %c0_14] : memref<128x32xf32, #tpu.memory_space<vmem>>, vector<128x32xf32>
    tpu.vector_store %arg5[%c0_13, %c0_14], %27 {strides = array<i32>} : memref<128x32xf32, #tpu.memory_space<vmem>>, vector<128x32xf32>,
    return
  }
  func.func @transform_0(%arg0: i32) -> (i32, i32) {
    %c0_i32 = arith.constant 0 : i32
    %c0_i32_0 = arith.constant 0 : i32
    %c0_i32_1 = arith.constant 0 : i32
    return %c0_i32, %c0_i32_0 : i32, i32
  }
  func.func @transform_1(%arg0: i32) -> (i32, i32) {
    %c0_i32 = arith.constant 0 : i32
    %c0_i32_0 = arith.constant 0 : i32
    return %c0_i32, %arg0 : i32, i32
  }
  func.func @transform_2(%arg0: i32) -> (i32, i32) {
    %c0_i32 = arith.constant 0 : i32
    %c0_i32_0 = arith.constant 0 : i32
    return %c0_i32, %arg0 : i32, i32
  }
  func.func @transform_3(%arg0: i32) -> (i32, i32) {
    %c0_i32 = arith.constant 0 : i32
    %c0_i32_0 = arith.constant 0 : i32
    return %c0_i32, %arg0 : i32, i32
  }
  func.func @transform_4(%arg0: i32) -> (i32, i32) {
    %c0_i32 = arith.constant 0 : i32
    %c0_i32_0 = arith.constant 0 : i32
    return %c0_i32, %arg0 : i32, i32
  }
}

</mosaic_0001>

<llo_original>
// kernel: _conv_bn_impl.1
$region0: #{_conv_bn_impl.1}
  #allocation0 [shape = 'u32[]', space=smem, size = 0x4, offset = 0x4, fixed_abs, tag = 'smem constant byte address 0x4 - core index']
  #allocation1 [shape = 'u32[144,128]{1,0:T(1,128)}', space=vmem, size = 0x12000, scoped, tag = 'internal scratch']
  %s0 = inlined_call_operand.vmem [shape: f32[128,144], index: 0, kind: input, shape index: {}]
  %s1 = inlined_call_operand.vmem [shape: f32[144,32], index: 1, kind: input, shape index: {}]
  %s2 = inlined_call_operand.vmem [shape: f32[1,32], index: 2, kind: input, shape index: {}]
  %s3 = inlined_call_operand.vmem [shape: f32[1,32], index: 3, kind: input, shape index: {}]
  %s4 = inlined_call_operand.hbm [shape: f32[128,32], index: 4, kind: output, shape index: {}]
  %s5 = sld [smem:[#allocation0]]
  $region26: #{_conv_bn_impl.1} parent=0
    _
  %s7 = ssub.s32 1, %s5
  %s8 = scalar_select 0, %s7, %s5
  $region1: #{_conv_bn_impl.1} parent=0
    #allocation2 [shape = 'u8[65536]{0}', space=vmem, size = 0x10000, scoped, tag = 'output window, operand 0, single buffered']
    #allocation3 [shape = 's32[1]{0}', space=sflag, size = 0x4, scoped, tag = 'scoped memory for _conv_bn_impl.1']
    %9 = vsyncpa [#allocation3], 0
    // Predicated region
    $region2: #{_conv_bn_impl.1} parent=1 // pred_check
      _
    $region3: #{_conv_bn_impl.1} parent=1 // pred_check_branch
      %11 = sbr.rel (0) target = $region5
    $region4: #{_conv_bn_impl.1} parent=1 // pred_region
      _
    $region5: #{_conv_bn_impl.1} parent=1 // pred_fallthru
      _
    // Predicated region
    $region6: #{_conv_bn_impl.1} parent=1 // pred_check
      _
    $region7: #{_conv_bn_impl.1} parent=1 // pred_check_branch
      %13 = sbr.rel (0) target = $region9
    $region8: #{_conv_bn_impl.1} parent=1 // pred_region
      _
    $region9: #{_conv_bn_impl.1} parent=1 // pred_fallthru
      _
    // Predicated region
    $region10: #{_conv_bn_impl.1} parent=1 // pred_check
      _
    $region11: #{_conv_bn_impl.1} parent=1 // pred_check_branch
      %15 = sbr.rel (0) target = $region13
    $region12: #{_conv_bn_impl.1} parent=1 // pred_region
      _
    $region13: #{_conv_bn_impl.1} parent=1 // pred_fallthru
      _
    // Predicated region
    $region14: #{_conv_bn_impl.1} parent=1 // pred_check
      _
    $region15: #{_conv_bn_impl.1} parent=1 // pred_check_branch
      %17 = sbr.rel (0) target = $region17
    $region16: #{_conv_bn_impl.1} parent=1 // pred_region
      _
    $region17: #{_conv_bn_impl.1} parent=1 // pred_fallthru
      _
    %v18 = vld [vmem:[%s0] sm:$0xff]
    %v19 = vld [vmem:[%s0 + $0x8] sm:$0xff]
    %v20 = vld [vmem:[%s0 + $0x10] sm:$0xff]
    %v21 = vld [vmem:[%s0 + $0x18] sm:$0xff]
    %v22 = vld [vmem:[%s0 + $0x20] sm:$0xff]
    %v23 = vld [vmem:[%s0 + $0x28] sm:$0xff]
    %v24 = vld [vmem:[%s0 + $0x30] sm:$0xff]
    %v25 = vld [vmem:[%s0 + $0x38] sm:$0xff]
    %v26 = vld [vmem:[%s0 + $0x40] sm:$0xff]
    %v27 = vld [vmem:[%s0 + $0x48] sm:$0xff]
    %v28 = vld [vmem:[%s0 + $0x50] sm:$0xff]
    %v29 = vld [vmem:[%s0 + $0x58] sm:$0xff]
    %v30 = vld [vmem:[%s0 + $0x60] sm:$0xff]
    %v31 = vld [vmem:[%s0 + $0x68] sm:$0xff]
    %v32 = vld [vmem:[%s0 + $0x70] sm:$0xff]
    %v33 = vld [vmem:[%s0 + $0x78] sm:$0xff]
    %v34 = vld [vmem:[%s0 + $0x80] sm:$0xff]
    %v35 = vld [vmem:[%s0 + $0x88] sm:$0xff]
    %v36 = vld [vmem:[%s0 + $0x90] sm:$0xff]
    %v37 = vld [vmem:[%s0 + $0x98] sm:$0xff]
    %v38 = vld [vmem:[%s0 + $0xa0] sm:$0xff]
    %v39 = vld [vmem:[%s0 + $0xa8] sm:$0xff]
    %v40 = vld [vmem:[%s0 + $0xb0] sm:$0xff]
    %v41 = vld [vmem:[%s0 + $0xb8] sm:$0xff]
    %v42 = vld [vmem:[%s0 + $0xc0] sm:$0xff]
    %v43 = vld [vmem:[%s0 + $0xc8] sm:$0xff]
    %v44 = vld [vmem:[%s0 + $0xd0] sm:$0xff]
    %v45 = vld [vmem:[%s0 + $0xd8] sm:$0xff]
    %v46 = vld [vmem:[%s0 + $0xe0] sm:$0xff]
    %v47 = vld [vmem:[%s0 + $0xe8] sm:$0xff]
    %v48 = vld [vmem:[%s0 + $0xf0] sm:$0xff]
    %v49 = vld [vmem:[%s0 + $0xf8] sm:$0xff]
    %v50 = vld [vmem:[%s1] sm:$0xff]
    %v51 = vld [vmem:[%s1 + $0x8] sm:$0xff]
    %v52 = vld [vmem:[%s1 + $0x10] sm:$0xff]
    %v53 = vld [vmem:[%s1 + $0x18] sm:$0xff]
    %v54 = vld [vmem:[%s1 + $0x20] sm:$0xff]
    %v55 = vld [vmem:[%s1 + $0x28] sm:$0xff]
    %v56 = vld [vmem:[%s1 + $0x30] sm:$0xff]
    %v57 = vld [vmem:[%s1 + $0x38] sm:$0xff]
    %v58 = vld [vmem:[%s1 + $0x40] sm:$0xff]
    %v59 = vld [vmem:[%s1 + $0x48] sm:$0xff]
    %v60 = vld [vmem:[%s1 + $0x50] sm:$0xff]
    %v61 = vld [vmem:[%s1 + $0x58] sm:$0xff]
    %v62 = vld [vmem:[%s1 + $0x60] sm:$0xff]
    %v63 = vld [vmem:[%s1 + $0x68] sm:$0xff]
    %v64 = vld [vmem:[%s1 + $0x70] sm:$0xff]
    %v65 = vld [vmem:[%s1 + $0x78] sm:$0xff]
    %v66 = vld [vmem:[%s1 + $0x80] sm:$0xff]
    %v67 = vld [vmem:[%s1 + $0x88] sm:$0xff]
    %vm68 = vcmask 130048
    %v70 = vsel %vm68, %v19, 0
    %v73 = vsel %vm68, %v21, 0
    %v76 = vsel %vm68, %v23, 0
    %v79 = vsel %vm68, %v25, 0
    %v82 = vsel %vm68, %v27, 0
    %v85 = vsel %vm68, %v29, 0
    %v88 = vsel %vm68, %v31, 0
    %v91 = vsel %vm68, %v33, 0
    %v94 = vsel %vm68, %v35, 0
    %v97 = vsel %vm68, %v37, 0
    %v100 = vsel %vm68, %v39, 0
    %v103 = vsel %vm68, %v41, 0
    %v106 = vsel %vm68, %v43, 0
    %v109 = vsel %vm68, %v45, 0
    %v112 = vsel %vm68, %v47, 0
    %v115 = vsel %vm68, %v49, 0
    %117 = vmatprep.subr.mxu0 0.0
    %118 = vmatpush1.msra.mxu0 %v50
    %119 = vmatprep.subr.mxu0 0.0
    %120 = vmatpush1.msra.mxu0 %v51
    %121 = vmatprep.subr.mxu0 0.0
    %122 = vmatpush1.msra.mxu0 %v52
    %123 = vmatprep.subr.mxu0 0.0
    %124 = vmatpush1.msra.mxu0 %v53
    %125 = vmatprep.subr.mxu0 0.0
    %126 = vmatpush1.msra.mxu0 %v54
    %127 = vmatprep.subr.mxu0 0.0
    %128 = vmatpush1.msra.mxu0 %v55
    %129 = vmatprep.subr.mxu0 0.0
    %130 = vmatpush1.msra.mxu0 %v56
    %131 = vmatprep.subr.mxu0 0.0
    %132 = vmatpush1.msra.mxu0 %v57
    %133 = vmatprep.subr.mxu0 0.0
    %134 = vmatpush1.msra.mxu0 %v58
    %135 = vmatprep.subr.mxu0 0.0
    %136 = vmatpush1.msra.mxu0 %v59
    %137 = vmatprep.subr.mxu0 0.0
    %138 = vmatpush1.msra.mxu0 %v60
    %139 = vmatprep.subr.mxu0 0.0
    %140 = vmatpush1.msra.mxu0 %v61
    %141 = vmatprep.subr.mxu0 0.0
    %142 = vmatpush1.msra.mxu0 %v62
    %143 = vmatprep.subr.mxu0 0.0
    %144 = vmatpush1.msra.mxu0 %v63
    %145 = vmatprep.subr.mxu0 0.0
    %146 = vmatpush1.msra.mxu0 %v64
    %147 = vmatprep.subr.mxu0 0.0
    %148 = vmatpush1.msra.mxu0 %v65
    %149 = vmatprep.subr.mxu0 0.0
    %150 = vmatpush1.msra.mxu0 %v66
    %151 = vmatprep.subr.mxu0 0.0
    %152 = vmatpush1.msra.mxu0 %v67
    %153 = vmatprep.subr.mxu0 0.0
    %154 = vmatpush1.msra.mxu0 0.0
    %155 = vmatprep.subr.mxu0 0.0
    %156 = vmatpush1.msra.mxu0 0.0
    %157 = vmatprep.subr.mxu0 0.0
    %158 = vmatpush1.msra.mxu0 0.0
    %159 = vmatprep.subr.mxu0 0.0
    %160 = vmatpush1.msra.mxu0 0.0
    %161 = vmatprep.subr.mxu0 0.0
    %162 = vmatpush1.msra.mxu0 0.0
    %163 = vmatprep.subr.mxu0 0.0
    %164 = vmatpush1.msra.mxu0 0.0
    %165 = vmatprep.subr.mxu0 0.0
    %166 = vmatpush1.msra.mxu0 0.0
    %167 = vmatprep.subr.mxu0 0.0
    %168 = vmatpush1.msra.mxu0 0.0
    %169 = vmatprep.subr.mxu0 0.0
    %170 = vmatpush1.msra.mxu0 0.0
    %171 = vmatprep.subr.mxu0 0.0
    %172 = vmatpush1.msra.mxu0 0.0
    %173 = vmatprep.subr.mxu0 0.0
    %174 = vmatpush1.msra.mxu0 0.0
    %175 = vmatprep.subr.mxu0 0.0
    %176 = vmatpush1.msra.mxu0 0.0
    %177 = vmatprep.subr.mxu0 0.0
    %178 = vmatpush1.msra.mxu0 0.0
    %179 = vmatprep.subr.mxu0 0.0
    %180 = vmatpush1.msra.mxu0 0.0
    %181 = vmatprep.mubr.f32.mxu0 %v70
    %182 = vmatmul.mubr.f32.gmra.mrb[0].mxu0 %v18
    %v183 = vpop.f32.mrb[0].mxu0
    %v184 = vadd.f32 0.0, %v183
    %v185 = vpop.f32.mrb[0].mxu0
    %186 = vmatprep.mubr.f32.mxu0 %v73
    %187 = vmatmul.mubr.f32.gmra.mrb[0].mxu0 %v20
    %v188 = vpop.f32.mrb[0].mxu0
    %v189 = vadd.f32 0.0, %v188
    %v190 = vpop.f32.mrb[0].mxu0
    %191 = vmatprep.mubr.f32.mxu0 %v76
    %192 = vmatmul.mubr.f32.gmra.mrb[0].mxu0 %v22
    %v193 = vpop.f32.mrb[0].mxu0
    %v194 = vadd.f32 0.0, %v193
    %v195 = vpop.f32.mrb[0].mxu0
    %196 = vmatprep.mubr.f32.mxu0 %v79
    %197 = vmatmul.mubr.f32.gmra.mrb[0].mxu0 %v24
    %v198 = vpop.f32.mrb[0].mxu0
    %v199 = vadd.f32 0.0, %v198
    %v200 = vpop.f32.mrb[0].mxu0
    %201 = vmatprep.mubr.f32.mxu0 %v82
    %202 = vmatmul.mubr.f32.gmra.mrb[0].mxu0 %v26
    %v203 = vpop.f32.mrb[0].mxu0
    %v204 = vadd.f32 0.0, %v203
    %v205 = vpop.f32.mrb[0].mxu0
    %206 = vmatprep.mubr.f32.mxu0 %v85
    %207 = vmatmul.mubr.f32.gmra.mrb[0].mxu0 %v28
    %v208 = vpop.f32.mrb[0].mxu0
    %v209 = vadd.f32 0.0, %v208
    %v210 = vpop.f32.mrb[0].mxu0
    %211 = vmatprep.mubr.f32.mxu0 %v88
    %212 = vmatmul.mubr.f32.gmra.mrb[0].mxu0 %v30
    %v213 = vpop.f32.mrb[0].mxu0
    %v214 = vadd.f32 0.0, %v213
    %v215 = vpop.f32.mrb[0].mxu0
    %216 = vmatprep.mubr.f32.mxu0 %v91
    %217 = vmatmul.mubr.f32.gmra.mrb[0].mxu0 %v32
    %v218 = vpop.f32.mrb[0].mxu0
    %v219 = vadd.f32 0.0, %v218
    %v220 = vpop.f32.mrb[0].mxu0
    %221 = vmatprep.mubr.f32.mxu0 %v94
    %222 = vmatmul.mubr.f32.gmra.mrb[0].mxu0 %v34
    %v223 = vpop.f32.mrb[0].mxu0
    %v224 = vadd.f32 0.0, %v223
    %v225 = vpop.f32.mrb[0].mxu0
    %226 = vmatprep.mubr.f32.mxu0 %v97
    %227 = vmatmul.mubr.f32.gmra.mrb[0].mxu0 %v36
    %v228 = vpop.f32.mrb[0].mxu0
    %v229 = vadd.f32 0.0, %v228
    %v230 = vpop.f32.mrb[0].mxu0
    %231 = vmatprep.mubr.f32.mxu0 %v100
    %232 = vmatmul.mubr.f32.gmra.mrb[0].mxu0 %v38
    %v233 = vpop.f32.mrb[0].mxu0
    %v234 = vadd.f32 0.0, %v233
    %v235 = vpop.f32.mrb[0].mxu0
    %236 = vmatprep.mubr.f32.mxu0 %v103
    %237 = vmatmul.mubr.f32.gmra.mrb[0].mxu0 %v40
    %v238 = vpop.f32.mrb[0].mxu0
    %v239 = vadd.f32 0.0, %v238
    %v240 = vpop.f32.mrb[0].mxu0
    %241 = vmatprep.mubr.f32.mxu0 %v106
    %242 = vmatmul.mubr.f32.gmra.mrb[0].mxu0 %v42
    %v243 = vpop.f32.mrb[0].mxu0
    %v244 = vadd.f32 0.0, %v243
    %v245 = vpop.f32.mrb[0].mxu0
    %246 = vmatprep.mubr.f32.mxu0 %v109
    %247 = vmatmul.mubr.f32.gmra.mrb[0].mxu0 %v44
    %v248 = vpop.f32.mrb[0].mxu0
    %v249 = vadd.f32 0.0, %v248
    %v250 = vpop.f32.mrb[0].mxu0
    %251 = vmatprep.mubr.f32.mxu0 %v112
    %252 = vmatmul.mubr.f32.gmra.mrb[0].mxu0 %v46
    %v253 = vpop.f32.mrb[0].mxu0
    %v254 = vadd.f32 0.0, %v253
    %v255 = vpop.f32.mrb[0].mxu0
    %256 = vmatprep.mubr.f32.mxu0 %v115
    %257 = vmatmul.mubr.f32.gmra.mrb[0].mxu0 %v48
    %v258 = vpop.f32.mrb[0].mxu0
    %v259 = vadd.f32 0.0, %v258
    %v260 = vpop.f32.mrb[0].mxu0
    %261 = vdwg.mxu0
    %vm262 = vcmask 261120
    %v263 = vsel %vm262, %v184, 0.0
    %v264 = vsel %vm262, %v189, 0.0
    %v265 = vadd.f32 %v263, %v264
    %v266 = vsel %vm262, %v194, 0.0
    %v267 = vadd.f32 %v265, %v266
    %v268 = vsel %vm262, %v199, 0.0
    %v269 = vadd.f32 %v267, %v268
    %v270 = vsel %vm262, %v204, 0.0
    %v271 = vadd.f32 %v269, %v270
    %v272 = vsel %vm262, %v209, 0.0
    %v273 = vadd.f32 %v271, %v272
    %v274 = vsel %vm262, %v214, 0.0
    %v275 = vadd.f32 %v273, %v274
    %v276 = vsel %vm262, %v219, 0.0
    %v277 = vadd.f32 %v275, %v276
    %v278 = vsel %vm262, %v224, 0.0
    %v279 = vadd.f32 %v277, %v278
    %v280 = vsel %vm262, %v229, 0.0
    %v281 = vadd.f32 %v279, %v280
    %v282 = vsel %vm262, %v234, 0.0
    %v283 = vadd.f32 %v281, %v282
    %v284 = vsel %vm262, %v239, 0.0
    %v285 = vadd.f32 %v283, %v284
    %v286 = vsel %vm262, %v244, 0.0
    %v287 = vadd.f32 %v285, %v286
    %v288 = vsel %vm262, %v249, 0.0
    %v289 = vadd.f32 %v287, %v288
    %v290 = vsel %vm262, %v254, 0.0
    %v291 = vadd.f32 %v289, %v290
    %v292 = vsel %vm262, %v259, 0.0
    %v293 = vadd.f32 %v291, %v292
    %v294 = vrot.slane %v293, 4
    %v295 = vadd.f32 %v293, %v294
    %v296 = vrot.slane %v295, 2
    %v297 = vadd.f32 %v295, %v296
    %v298 = vrot.slane %v297, 1
    %v299 = vadd.f32 %v297, %v298
    %v300 = vmul.f32 %v299, 0.0078125
    %v301 = vmul.f32 %v184, %v184
    %v302 = vmul.f32 %v189, %v189
    %v303 = vmul.f32 %v194, %v194
    %v304 = vmul.f32 %v199, %v199
    %v305 = vmul.f32 %v204, %v204
    %v306 = vmul.f32 %v209, %v209
    %v307 = vmul.f32 %v214, %v214
    %v308 = vmul.f32 %v219, %v219
    %v309 = vmul.f32 %v224, %v224
    %v310 = vmul.f32 %v229, %v229
    %v311 = vmul.f32 %v234, %v234
    %v312 = vmul.f32 %v239, %v239
    %v313 = vmul.f32 %v244, %v244
    %v314 = vmul.f32 %v249, %v249
    %v315 = vmul.f32 %v254, %v254
    %v316 = vmul.f32 %v259, %v259
    %v317 = vsel %vm262, %v301, 0.0
    %v318 = vsel %vm262, %v302, 0.0
    %v319 = vadd.f32 %v317, %v318
    %v320 = vsel %vm262, %v303, 0.0
    %v321 = vadd.f32 %v319, %v320
    %v322 = vsel %vm262, %v304, 0.0
    %v323 = vadd.f32 %v321, %v322
    %v324 = vsel %vm262, %v305, 0.0
    %v325 = vadd.f32 %v323, %v324
    %v326 = vsel %vm262, %v306, 0.0
    %v327 = vadd.f32 %v325, %v326
    %v328 = vsel %vm262, %v307, 0.0
    %v329 = vadd.f32 %v327, %v328
    %v330 = vsel %vm262, %v308, 0.0
    %v331 = vadd.f32 %v329, %v330
    %v332 = vsel %vm262, %v309, 0.0
    %v333 = vadd.f32 %v331, %v332
    %v334 = vsel %vm262, %v310, 0.0
    %v335 = vadd.f32 %v333, %v334
    %v336 = vsel %vm262, %v311, 0.0
    %v337 = vadd.f32 %v335, %v336
    %v338 = vsel %vm262, %v312, 0.0
    %v339 = vadd.f32 %v337, %v338
    %v340 = vsel %vm262, %v313, 0.0
    %v341 = vadd.f32 %v339, %v340
    %v342 = vsel %vm262, %v314, 0.0
    %v343 = vadd.f32 %v341, %v342
    %v344 = vsel %vm262, %v315, 0.0
    %v345 = vadd.f32 %v343, %v344
    %v346 = vsel %vm262, %v316, 0.0
    %v347 = vadd.f32 %v345, %v346
    %v348 = vrot.slane %v347, 4
    %v349 = vadd.f32 %v347, %v348
    %v350 = vrot.slane %v349, 2
    %v351 = vadd.f32 %v349, %v350
    %v352 = vrot.slane %v351, 1
    %v353 = vadd.f32 %v351, %v352
    %v354 = vmul.f32 %v353, 0.0078125
    %v355 = vmul.f32 %v300, %v300
    %v356 = vsub.f32 %v354, %v355
    %v357 = vld [vmem:[%s2] sm:$0x1]
    %v358 = vadd.f32 %v356, 1e-05
    %v359 = vrsqrt.pop %v358
    %v360 = vmul.f32 %v357, %v359
    %v361 = vld [vmem:[%s3] sm:$0x1]
    %v362 = vmul.f32 %v300, %v360
    %v363 = vsub.f32 %v361, %v362
    %v365 = vlaneseq
    %v366 = vshrl.u32 %v365, 7
    %v367 = vsub.s32 0, %v366
    %v368 = vrot.slane %v360, %v367
    %v370 = vmul.f32 %v184, %v368
    %v371 = vmul.f32 %v189, %v368
    %v372 = vmul.f32 %v194, %v368
    %v373 = vmul.f32 %v199, %v368
    %v374 = vmul.f32 %v204, %v368
    %v375 = vmul.f32 %v209, %v368
    %v376 = vmul.f32 %v214, %v368
    %v377 = vmul.f32 %v219, %v368
    %v378 = vmul.f32 %v224, %v368
    %v379 = vmul.f32 %v229, %v368
    %v380 = vmul.f32 %v234, %v368
    %v381 = vmul.f32 %v239, %v368
    %v382 = vmul.f32 %v244, %v368
    %v383 = vmul.f32 %v249, %v368
    %v384 = vmul.f32 %v254, %v368
    %v385 = vmul.f32 %v259, %v368
    %v387 = vlaneseq
    %v388 = vshrl.u32 %v387, 7
    %v389 = vsub.s32 0, %v388
    %v390 = vrot.slane %v363, %v389
    %v392 = vadd.f32 %v370, %v390
    %v393 = vadd.f32 %v371, %v390
    %v394 = vadd.f32 %v372, %v390
    %v395 = vadd.f32 %v373, %v390
    %v396 = vadd.f32 %v374, %v390
    %v397 = vadd.f32 %v375, %v390
    %v398 = vadd.f32 %v376, %v390
    %v399 = vadd.f32 %v377, %v390
    %v400 = vadd.f32 %v378, %v390
    %v401 = vadd.f32 %v379, %v390
    %v402 = vadd.f32 %v380, %v390
    %v403 = vadd.f32 %v381, %v390
    %v404 = vadd.f32 %v382, %v390
    %v405 = vadd.f32 %v383, %v390
    %v406 = vadd.f32 %v384, %v390
    %v407 = vadd.f32 %v385, %v390
    %v408 = vmax.f32 %v392, 0.0
    %v409 = vmax.f32 %v393, 0.0
    %v410 = vmax.f32 %v394, 0.0
    %v411 = vmax.f32 %v395, 0.0
    %v412 = vmax.f32 %v396, 0.0
    %v413 = vmax.f32 %v397, 0.0
    %v414 = vmax.f32 %v398, 0.0
    %v415 = vmax.f32 %v399, 0.0
    %v416 = vmax.f32 %v400, 0.0
    %v417 = vmax.f32 %v401, 0.0
    %v418 = vmax.f32 %v402, 0.0
    %v419 = vmax.f32 %v403, 0.0
    %v420 = vmax.f32 %v404, 0.0
    %v421 = vmax.f32 %v405, 0.0
    %v422 = vmax.f32 %v406, 0.0
    %v423 = vmax.f32 %v407, 0.0
    %424 = vst.msk [vmem:[#allocation2] sm:$0xff] %vm262, %v408
    %425 = vst.msk [vmem:[#allocation2 + $0x8] sm:$0xff] %vm262, %v409
    %426 = vst.msk [vmem:[#allocation2 + $0x10] sm:$0xff] %vm262, %v410
    %427 = vst.msk [vmem:[#allocation2 + $0x18] sm:$0xff] %vm262, %v411
    %428 = vst.msk [vmem:[#allocation2 + $0x20] sm:$0xff] %vm262, %v412
    %429 = vst.msk [vmem:[#allocation2 + $0x28] sm:$0xff] %vm262, %v413
    %430 = vst.msk [vmem:[#allocation2 + $0x30] sm:$0xff] %vm262, %v414
    %431 = vst.msk [vmem:[#allocation2 + $0x38] sm:$0xff] %vm262, %v415
    %432 = vst.msk [vmem:[#allocation2 + $0x40] sm:$0xff] %vm262, %v416
    %433 = vst.msk [vmem:[#allocation2 + $0x48] sm:$0xff] %vm262, %v417
    %434 = vst.msk [vmem:[#allocation2 + $0x50] sm:$0xff] %vm262, %v418
    %435 = vst.msk [vmem:[#allocation2 + $0x58] sm:$0xff] %vm262, %v419
    %436 = vst.msk [vmem:[#allocation2 + $0x60] sm:$0xff] %vm262, %v420
    %437 = vst.msk [vmem:[#allocation2 + $0x68] sm:$0xff] %vm262, %v421
    %438 = vst.msk [vmem:[#allocation2 + $0x70] sm:$0xff] %vm262, %v422
    %439 = vst.msk [vmem:[#allocation2 + $0x78] sm:$0xff] %vm262, %v423
    // Predicated region
    $region18: #{_conv_bn_impl.1} parent=1 // pred_check
      _
    $region19: #{_conv_bn_impl.1} parent=1 // pred_check_branch
      %441 = sbr.rel (0) target = $region21
    $region20: #{_conv_bn_impl.1} parent=1 // pred_region
      %s443 = ssub.s32 2048, 2048
      %444 = vsyncadd [#allocation3], %s443
      %s445 = sshll.u32 [#allocation2], 4
      %s446 = int_to_ptr.vmem [resolvable:$true] %s445
      %451 = dma.vmem_to_hbm [thread:$0]  %s446, 2048, %s4, [#allocation3], 128, 128, 8
    $region21: #{_conv_bn_impl.1} parent=1 // pred_fallthru
      _
    // Predicated region
    $region22: #{_conv_bn_impl.1} parent=1 // pred_check
      _
    $region23: #{_conv_bn_impl.1} parent=1 // pred_check_branch
      %453 = sbr.rel (0) target = $region25
    $region24: #{_conv_bn_impl.1} parent=1 // pred_region
      %454 = dma.done [#allocation3], 2048
    $region25: #{_conv_bn_impl.1} parent=1 // pred_fallthru
      _
    %455 = vsyncpa [#allocation3], 1

</llo_original>
